<compile_context>
chip_gen: v6e
topology: v6e:2x2x1
jax: 0.10.0
libtpu: 0.0.40
codegen_flags: <defaults>
</compile_context>

<pallas_src>
import functools

import numpy as np
import jax
import jax.numpy as jnp
from jax.experimental import pallas as pl
from jax.experimental.pallas import tpu as pltpu

LANES = 128
TILE_ROWS = 1024      # (1024, 128) f32 block = 512 KiB; fits VMEM on v5e/v6e/v7x
NUM_SPLITS = 2        # leading "parallel" grid axis (dual-TC on v7x; harmless elsewhere)


def _round_up(v, m):
    return ((v + m - 1) // m) * m


def _hist_kernel(x_ref, gid_ref, acc_ref, *, t_vals, step, t_size, fast_bins1):
    """Accumulates per-lane partial histogram sums and group counts.

    acc_ref block layout (1, acc_rows, 128) f32 (per core-split):
      fast_bins1 (num_bins == 1):
        rows 0..2 : per-lane partial sums of m_g * sigmoid(x)   (g = pos/uh/ul)
        rows 3..5 : per-lane partial element counts of group g
      general:
        rows [g*t_size + j] : per-lane partial sums of m_g * relu(step - |s - t_j|)
        rows [3*t_size + g] : per-lane partial element counts of group g
    Final cross-lane reduction happens in the plain-JAX epilogue.
    """

    @pl.when(pl.program_id(1) == 0)
    def _():
        acc_ref[...] = jnp.zeros_like(acc_ref)

    scores = jax.nn.sigmoid(x_ref[...])                 # (tile_rows, 128) f32
    gid = gid_ref[...].astype(jnp.int32)                # int8 -> int32 compares (VPU)
    masks = [(gid == g).astype(jnp.float32) for g in range(3)]   # pos / unl-high / unl-low

    if fast_bins1:
        for g, m in enumerate(masks):
            acc_ref[0, g, :] += jnp.sum(m * scores, axis=0)
            acc_ref[0, 3 + g, :] += jnp.sum(m, axis=0)
    else:
        # TODO(synk): for large num_bins an MXU formulation (masks @ per-bin
        # contribs) would be preferable; the unrolled VPU loop is fine for small
        # num_bins.
        for j, tj in enumerate(t_vals):
            contrib = jnp.maximum(step - jnp.abs(scores - tj), 0.0)
            for g, m in enumerate(masks):
                acc_ref[0, g * t_size + j, :] += jnp.sum(m * contrib, axis=0)
        for g, m in enumerate(masks):
            acc_ref[0, 3 * t_size + g, :] += jnp.sum(m, axis=0)


class LabelDistributionLossPallas:
    def __init__(self, prior_high, prior_low, num_bins=1, proxy="polar", dist="L1"):
        if dist != "L1":
            raise NotImplementedError(f"The distance: {dist} is not defined!")
        if proxy != "polar":
            raise NotImplementedError(f"The proxy: {proxy} is not defined!")
        self.prior_high = float(prior_high)
        self.prior_low = float(prior_low)
        self.frac_prior = 1.0 / (2.0 * (prior_high + prior_low))
        self.num_bins = int(num_bins)
        self.step = 1.0 / num_bins
        self.t_size = num_bins + 1
        self.t_vals = tuple(float(v) for v in np.linspace(0.0, 1.0, self.t_size))

        if self.num_bins == 1:
            self.acc_rows = 8                     # 6 used rows, padded to sublane x8
        else:
            self.acc_rows = _round_up(3 * self.t_size + 3, 8)

        proxy_p = np.zeros(self.t_size, dtype=np.float32)
        proxy_n = np.zeros(self.t_size, dtype=np.float32)
        proxy_p[-1] = 1.0
        proxy_n[0] = 1.0
        self.proxy_p = jnp.asarray(proxy_p, dtype=jnp.float32)
        self.proxy_mix_high = jnp.asarray(
            prior_high * proxy_p + (1.0 - prior_high) * proxy_n, dtype=jnp.float32)
        self.proxy_mix_low = jnp.asarray(
            prior_low * proxy_p + (1.0 - prior_low) * proxy_n, dtype=jnp.float32)

        self._fn = jax.jit(self._forward)

    def __call__(self, outputs, labels, unlabeled_high_mask):
        return self._fn(outputs, labels, unlabeled_high_mask)

    def _forward(self, outputs, labels, unlabeled_high_mask):
        x = jnp.ravel(outputs).astype(jnp.float32)
        lab = jnp.ravel(labels).astype(jnp.float32)
        um = jnp.ravel(unlabeled_high_mask).astype(jnp.bool_)
        n = x.shape[0]

        # Pack labels + mask (+ padding validity) into one int8 group-id stream.
        is_pos = lab == 1.0
        is_neg = lab == 0.0
        gid = jnp.where(
            is_pos, 0,
            jnp.where(is_neg & um, 1,
                      jnp.where(is_neg & jnp.logical_not(um), 2, 3))
        ).astype(jnp.int8)

        # ---- adaptive tiling (all shapes static at trace time) ----
        rows = _round_up(max(1, (n + LANES - 1) // LANES), 8)
        if rows <= TILE_ROWS:
            tile_rows = rows                      # single full-array tile (small input)
            num_splits = 1
            blocks_per_split = 1
        else:
            tile_rows = TILE_ROWS
            num_tiles = (rows + tile_rows - 1) // tile_rows
            num_splits = NUM_SPLITS if num_tiles >= NUM_SPLITS else 1
            num_tiles = _round_up(num_tiles, num_splits)
            blocks_per_split = num_tiles // num_splits
            rows = num_tiles * tile_rows

        n_pad = rows * LANES
        pad = n_pad - n
        x = jnp.pad(x, (0, pad)).reshape(rows, LANES)                       # sigmoid(0) masked out
        gid = jnp.pad(gid, (0, pad), constant_values=3).reshape(rows, LANES)  # 3 = padding

        grid = (num_splits, blocks_per_split)

        def in_map(c, i, bps=blocks_per_split):
            return (c * bps + i, 0)

        in_spec = pl.BlockSpec((tile_rows, LANES), in_map)
        out_spec = pl.BlockSpec((1, self.acc_rows, LANES), lambda c, i: (c, 0, 0))

        kernel = functools.partial(
            _hist_kernel, t_vals=self.t_vals, step=self.step,
            t_size=self.t_size, fast_bins1=(self.num_bins == 1))

        acc = pl.pallas_call(
            kernel,
            out_shape=jax.ShapeDtypeStruct(
                (num_splits, self.acc_rows, LANES), jnp.float32),
            grid=grid,
            in_specs=[in_spec, in_spec],
            out_specs=out_spec,
            compiler_params=pltpu.CompilerParams(
                dimension_semantics=("parallel", "arbitrary")),
        )(x, gid)

        # Tiny finalize: cross-lane + cross-core reduce, normalize, L1 vs proxies.
        vec = jnp.sum(acc, axis=(0, 2))                            # (acc_rows,)
        if self.num_bins == 1:
            sum_s = vec[0:3]                                       # per-group sum of sigmoid
            cnts = vec[3:6]                                        # per-group counts
            sums = jnp.stack([cnts - sum_s, sum_s], axis=1)        # (3, 2): bins t=0, t=1
        else:
            sums = vec[: 3 * self.t_size].reshape(3, self.t_size)  # (3, t_size)
            cnts = vec[3 * self.t_size: 3 * self.t_size + 3]       # (3,)

        safe_cnt = jnp.maximum(cnts, 1.0)
        hists = sums / (safe_cnt[:, None] * self.step)
        proxies = jnp.stack([self.proxy_p, self.proxy_mix_high, self.proxy_mix_low])
        losses = jnp.mean(jnp.abs(hists - proxies), axis=1)        # (3,)
        # empty groups contribute 0, same as the torch `if numel() > 0` guards
        losses = jnp.where(cnts > 0, losses, 0.0)
        return losses[0] + self.frac_prior * losses[1] + self.frac_prior * losses[2]


def _reference_loss(outputs, labels, umask, prior_high, prior_low, num_bins):
    """Pure-numpy replica of the PyTorch forward semantics."""
    step = 1.0 / num_bins
    t = np.linspace(0.0, 1.0, num_bins + 1).astype(np.float64)
    t_size = num_bins + 1
    frac_prior = 1.0 / (2.0 * (prior_high + prior_low))

    proxy_p = np.zeros(t_size)
    proxy_n = np.zeros(t_size)
    proxy_p[-1] = 1.0
    proxy_n[0] = 1.0
    proxy_mix_high = prior_high * proxy_p + (1.0 - prior_high) * proxy_n
    proxy_mix_low = prior_low * proxy_p + (1.0 - prior_low) * proxy_n

    scores = 1.0 / (1.0 + np.exp(-outputs.astype(np.float64).reshape(-1)))
    labels = labels.reshape(-1)
    umask = umask.reshape(-1).astype(bool)

    def histogram(s):
        h = np.abs(s[:, None] - t[None, :])
        h = np.where(h > step, 0.0, step - h)
        return h.sum(axis=0) / (len(s) * step)

    s_p = scores[labels == 1]
    s_uh = scores[np.logical_and(labels == 0, umask)]
    s_ul = scores[np.logical_and(labels == 0, ~umask)]

    l_p = np.mean(np.abs(histogram(s_p) - proxy_p)) if s_p.size else 0.0
    l_uh = np.mean(np.abs(histogram(s_uh) - proxy_mix_high)) if s_uh.size else 0.0
    l_ul = np.mean(np.abs(histogram(s_ul) - proxy_mix_low)) if s_ul.size else 0.0
    return l_p + frac_prior * l_uh + frac_prior * l_ul


if __name__ == "__main__":
    prior_high, prior_low, num_bins = 0.4, 0.1, 1

    loss_mod = LabelDistributionLossPallas(prior_high, prior_low, num_bins=num_bins)

    key = jax.random.PRNGKey(0)
    k1, k2, k3 = jax.random.split(key, 3)
    N = 2000  # flat score count (the module flattens its inputs anyway)
    outputs = jax.random.normal(k1, (N,), dtype=jnp.float32)
    labels = (jax.random.uniform(k2, (N,)) < 0.3).astype(jnp.float32)
    unlabeled_high_mask = jax.random.uniform(k3, (N,)) < 0.5

    loss = loss_mod(outputs, labels, unlabeled_high_mask)
    loss = jax.block_until_ready(loss)

    ref = _reference_loss(
        np.asarray(outputs), np.asarray(labels), np.asarray(unlabeled_high_mask),
        prior_high, prior_low, num_bins,
    )
    np.testing.assert_allclose(np.asarray(loss), ref, rtol=2e-5, atol=2e-5)

    print("KERNEL_OK")
</pallas_src>

<mosaic_0001>
module attributes {stable_mosaic.version = 11 : i64} {
  func.func @_hist_kernel(%arg0: i32, %arg1: i32, %arg2: memref<16x128xf32, #tpu.memory_space<vmem>>, %arg3: memref<16x128xi8, #tpu.memory_space<vmem>>, %arg4: memref<1x8x128xf32, #tpu.memory_space<vmem>>) attributes {dimension_semantics = [#tpu.dimension_semantics<parallel>, #tpu.dimension_semantics<arbitrary>], iteration_bounds = array<i64: 1, 1>, scalar_prefetch = 0 : i64, scratch_operands = 0 : i64, tpu.core_type = #tpu.core_type<tc>, window_params = [{transform_indices = @transform_0, window_bounds = array<i64: 16, 128>}, {transform_indices = @transform_1, window_bounds = array<i64: 16, 128>}, {transform_indices = @transform_2, window_bounds = array<i64: 1, 8, 128>}]} {
    %c0_i32 = arith.constant 0 : i32
    %0 = arith.cmpi eq, %arg1, %c0_i32 : i32
    %1 = arith.extui %0 : i1 to i32
    %c0_i32_0 = arith.constant 0 : i32
    %2 = arith.cmpi ne, %1, %c0_i32_0 : i32
    scf.if %2 {
      %cst_42 = arith.constant 0.000000e+00 : f32
      %68 = vector.broadcast %cst_42 : f32 to vector<1x8x128xf32>
      %c0_43 = arith.constant 0 : index
      %c0_44 = arith.constant 0 : index
      %c0_45 = arith.constant 0 : index
      %69 = vector.load %arg4[%c0_43, %c0_44, %c0_45] : memref<1x8x128xf32, #tpu.memory_space<vmem>>, vector<1x8x128xf32>
      tpu.vector_store %arg4[%c0_43, %c0_44, %c0_45], %68 {strides = array<i32>} : memref<1x8x128xf32, #tpu.memory_space<vmem>>, vector<1x8x128xf32>,
    } else {
    }
    %c0 = arith.constant 0 : index
    %c0_1 = arith.constant 0 : index
    %3 = vector.load %arg2[%c0, %c0_1] : memref<16x128xf32, #tpu.memory_space<vmem>>, vector<16x128xf32>
    %4 = arith.negf %3 : vector<16x128xf32>
    %5 = math.exp %4 : vector<16x128xf32>
    %cst = arith.constant 1.000000e+00 : f32
    %6 = vector.broadcast %cst : f32 to vector<16x128xf32>
    %7 = arith.addf %6, %5 : vector<16x128xf32>
    %8 = arith.divf %6, %7 : vector<16x128xf32>
    %c0_2 = arith.constant 0 : index
    %c0_3 = arith.constant 0 : index
    %9 = vector.load %arg3[%c0_2, %c0_3] : memref<16x128xi8, #tpu.memory_space<vmem>>, vector<16x128xi8>
    %10 = arith.extsi %9 : vector<16x128xi8> to vector<16x128xi32>
    %c0_i32_4 = arith.constant 0 : i32
    %11 = vector.broadcast %c0_i32_4 : i32 to vector<16x128xi32>
    %12 = arith.cmpi eq, %10, %11 : vector<16x128xi32>
    %13 = arith.extui %12 : vector<16x128xi1> to vector<16x128xi32>
    %14 = arith.sitofp %13 : vector<16x128xi32> to vector<16x128xf32>
    %c1_i32 = arith.constant 1 : i32
    %15 = vector.broadcast %c1_i32 : i32 to vector<16x128xi32>
    %16 = arith.cmpi eq, %10, %15 : vector<16x128xi32>
    %17 = arith.extui %16 : vector<16x128xi1> to vector<16x128xi32>
    %18 = arith.sitofp %17 : vector<16x128xi32> to vector<16x128xf32>
    %c2_i32 = arith.constant 2 : i32
    %19 = vector.broadcast %c2_i32 : i32 to vector<16x128xi32>
    %20 = arith.cmpi eq, %10, %19 : vector<16x128xi32>
    %21 = arith.extui %20 : vector<16x128xi1> to vector<16x128xi32>
    %22 = arith.sitofp %21 : vector<16x128xi32> to vector<16x128xf32>
    %c0_5 = arith.constant 0 : index
    %c0_6 = arith.constant 0 : index
    %c0_7 = arith.constant 0 : index
    %23 = vector.load %arg4[%c0_5, %c0_6, %c0_7] : memref<1x8x128xf32, #tpu.memory_space<vmem>>, vector<1x1x128xf32>
    %24 = vector.shape_cast %23 : vector<1x1x128xf32> to vector<128xf32>
    %25 = arith.mulf %14, %8 : vector<16x128xf32>
    %cst_8 = arith.constant dense<0.000000e+00> : vector<128xf32>
    %26 = vector.multi_reduction <add>, %25, %cst_8 [0] : vector<16x128xf32> to vector<128xf32>
    %27 = arith.addf %24, %26 : vector<128xf32>
    %c0_9 = arith.constant 0 : index
    %c0_10 = arith.constant 0 : index
    %c0_11 = arith.constant 0 : index
    %28 = vector.load %arg4[%c0_9, %c0_10, %c0_11] : memref<1x8x128xf32, #tpu.memory_space<vmem>>, vector<1x1x128xf32>
    %29 = vector.shape_cast %28 : vector<1x1x128xf32> to vector<128xf32>
    %30 = vector.shape_cast %27 : vector<128xf32> to vector<1x1x128xf32>
    tpu.vector_store %arg4[%c0_9, %c0_10, %c0_11], %30 {strides = array<i32>} : memref<1x8x128xf32, #tpu.memory_space<vmem>>, vector<1x1x128xf32>,
    %c0_12 = arith.constant 0 : index
    %c3 = arith.constant 3 : index
    %c0_13 = arith.constant 0 : index
    %31 = vector.load %arg4[%c0_12, %c3, %c0_13] : memref<1x8x128xf32, #tpu.memory_space<vmem>>, vector<1x1x128xf32>
    %32 = vector.shape_cast %31 : vector<1x1x128xf32> to vector<128xf32>
    %cst_14 = arith.constant dense<0.000000e+00> : vector<128xf32>
    %33 = vector.multi_reduction <add>, %14, %cst_14 [0] : vector<16x128xf32> to vector<128xf32>
    %34 = arith.addf %32, %33 : vector<128xf32>
    %c0_15 = arith.constant 0 : index
    %c3_16 = arith.constant 3 : index
    %c0_17 = arith.constant 0 : index
    %35 = vector.load %arg4[%c0_15, %c3_16, %c0_17] : memref<1x8x128xf32, #tpu.memory_space<vmem>>, vector<1x1x128xf32>
    %36 = vector.shape_cast %35 : vector<1x1x128xf32> to vector<128xf32>
    %37 = vector.shape_cast %34 : vector<128xf32> to vector<1x1x128xf32>
    tpu.vector_store %arg4[%c0_15, %c3_16, %c0_17], %37 {strides = array<i32>} : memref<1x8x128xf32, #tpu.memory_space<vmem>>, vector<1x1x128xf32>,
    %c0_18 = arith.constant 0 : index
    %c1 = arith.constant 1 : index
    %c0_19 = arith.constant 0 : index
    %38 = vector.load %arg4[%c0_18, %c1, %c0_19] : memref<1x8x128xf32, #tpu.memory_space<vmem>>, vector<1x1x128xf32>
    %39 = vector.shape_cast %38 : vector<1x1x128xf32> to vector<128xf32>
    %40 = arith.mulf %18, %8 : vector<16x128xf32>
    %cst_20 = arith.constant dense<0.000000e+00> : vector<128xf32>
    %41 = vector.multi_reduction <add>, %40, %cst_20 [0] : vector<16x128xf32> to vector<128xf32>
    %42 = arith.addf %39, %41 : vector<128xf32>
    %c0_21 = arith.constant 0 : index
    %c1_22 = arith.constant 1 : index
    %c0_23 = arith.constant 0 : index
    %43 = vector.load %arg4[%c0_21, %c1_22, %c0_23] : memref<1x8x128xf32, #tpu.memory_space<vmem>>, vector<1x1x128xf32>
    %44 = vector.shape_cast %43 : vector<1x1x128xf32> to vector<128xf32>
    %45 = vector.shape_cast %42 : vector<128xf32> to vector<1x1x128xf32>
    tpu.vector_store %arg4[%c0_21, %c1_22, %c0_23], %45 {strides = array<i32>} : memref<1x8x128xf32, #tpu.memory_space<vmem>>, vector<1x1x128xf32>,
    %c0_24 = arith.constant 0 : index
    %c4 = arith.constant 4 : index
    %c0_25 = arith.constant 0 : index
    %46 = vector.load %arg4[%c0_24, %c4, %c0_25] : memref<1x8x128xf32, #tpu.memory_space<vmem>>, vector<1x1x128xf32>
    %47 = vector.shape_cast %46 : vector<1x1x128xf32> to vector<128xf32>
    %cst_26 = arith.constant dense<0.000000e+00> : vector<128xf32>
    %48 = vector.multi_reduction <add>, %18, %cst_26 [0] : vector<16x128xf32> to vector<128xf32>
    %49 = arith.addf %47, %48 : vector<128xf32>
    %c0_27 = arith.constant 0 : index
    %c4_28 = arith.constant 4 : index
    %c0_29 = arith.constant 0 : index
    %50 = vector.load %arg4[%c0_27, %c4_28, %c0_29] : memref<1x8x128xf32, #tpu.memory_space<vmem>>, vector<1x1x128xf32>
    %51 = vector.shape_cast %50 : vector<1x1x128xf32> to vector<128xf32>
    %52 = vector.shape_cast %49 : vector<128xf32> to vector<1x1x128xf32>
    tpu.vector_store %arg4[%c0_27, %c4_28, %c0_29], %52 {strides = array<i32>} : memref<1x8x128xf32, #tpu.memory_space<vmem>>, vector<1x1x128xf32>,
    %c0_30 = arith.constant 0 : index
    %c2 = arith.constant 2 : index
    %c0_31 = arith.constant 0 : index
    %53 = vector.load %arg4[%c0_30, %c2, %c0_31] : memref<1x8x128xf32, #tpu.memory_space<vmem>>, vector<1x1x128xf32>
    %54 = vector.shape_cast %53 : vector<1x1x128xf32> to vector<128xf32>
    %55 = arith.mulf %22, %8 : vector<16x128xf32>
    %cst_32 = arith.constant dense<0.000000e+00> : vector<128xf32>
    %56 = vector.multi_reduction <add>, %55, %cst_32 [0] : vector<16x128xf32> to vector<128xf32>
    %57 = arith.addf %54, %56 : vector<128xf32>
    %c0_33 = arith.constant 0 : index
    %c2_34 = arith.constant 2 : index
    %c0_35 = arith.constant 0 : index
    %58 = vector.load %arg4[%c0_33, %c2_34, %c0_35] : memref<1x8x128xf32, #tpu.memory_space<vmem>>, vector<1x1x128xf32>
    %59 = vector.shape_cast %58 : vector<1x1x128xf32> to vector<128xf32>
    %60 = vector.shape_cast %57 : vector<128xf32> to vector<1x1x128xf32>
    tpu.vector_store %arg4[%c0_33, %c2_34, %c0_35], %60 {strides = array<i32>} : memref<1x8x128xf32, #tpu.memory_space<vmem>>, vector<1x1x128xf32>,
    %c0_36 = arith.constant 0 : index
    %c5 = arith.constant 5 : index
    %c0_37 = arith.constant 0 : index
    %61 = vector.load %arg4[%c0_36, %c5, %c0_37] : memref<1x8x128xf32, #tpu.memory_space<vmem>>, vector<1x1x128xf32>
    %62 = vector.shape_cast %61 : vector<1x1x128xf32> to vector<128xf32>
    %cst_38 = arith.constant dense<0.000000e+00> : vector<128xf32>
    %63 = vector.multi_reduction <add>, %22, %cst_38 [0] : vector<16x128xf32> to vector<128xf32>
    %64 = arith.addf %62, %63 : vector<128xf32>
    %c0_39 = arith.constant 0 : index
    %c5_40 = arith.constant 5 : index
    %c0_41 = arith.constant 0 : index
    %65 = vector.load %arg4[%c0_39, %c5_40, %c0_41] : memref<1x8x128xf32, #tpu.memory_space<vmem>>, vector<1x1x128xf32>
    %66 = vector.shape_cast %65 : vector<1x1x128xf32> to vector<128xf32>
    %67 = vector.shape_cast %64 : vector<128xf32> to vector<1x1x128xf32>
    tpu.vector_store %arg4[%c0_39, %c5_40, %c0_41], %67 {strides = array<i32>} : memref<1x8x128xf32, #tpu.memory_space<vmem>>, vector<1x1x128xf32>,
    return
  }
  func.func @transform_0(%arg0: i32, %arg1: i32) -> (i32, i32) {
    %c1_i32 = arith.constant 1 : i32
    %0 = arith.muli %arg0, %c1_i32 : i32
    %1 = arith.addi %0, %arg1 : i32
    %c0_i32 = arith.constant 0 : i32
    %c0_i32_0 = arith.constant 0 : i32
    return %1, %c0_i32 : i32, i32
  }
  func.func @transform_1(%arg0: i32, %arg1: i32) -> (i32, i32) {
    %c1_i32 = arith.constant 1 : i32
    %0 = arith.muli %arg0, %c1_i32 : i32
    %1 = arith.addi %0, %arg1 : i32
    %c0_i32 = arith.constant 0 : i32
    %c0_i32_0 = arith.constant 0 : i32
    return %1, %c0_i32 : i32, i32
  }
  func.func @transform_2(%arg0: i32, %arg1: i32) -> (i32, i32, i32) {
    %c0_i32 = arith.constant 0 : i32
    %c0_i32_0 = arith.constant 0 : i32
    %c0_i32_1 = arith.constant 0 : i32
    return %arg0, %c0_i32, %c0_i32_0 : i32, i32, i32
  }
}

</mosaic_0001>

<llo_original>
// kernel: _forward.1
$region0: #{_forward.1}
  #allocation0 [shape = 'u32[]', space=smem, size = 0x4, offset = 0x4, fixed_abs, tag = 'smem constant byte address 0x4 - core index']
  #allocation1 [shape = 'u32[144,128]{1,0:T(1,128)}', space=vmem, size = 0x12000, scoped, tag = 'internal scratch']
  %s0 = inlined_call_operand.vmem [shape: f32[16,128], index: 0, kind: input, shape index: {}]
  %s1 = inlined_call_operand.vmem [shape: s8[16,128], index: 1, kind: input, shape index: {}]
  %s2 = inlined_call_operand.vmem [shape: f32[1,8,128], index: 2, kind: output, shape index: {}]
  %s3 = sld [smem:[#allocation0]]
  $region22: #{_forward.1} parent=0
    _
  %s5 = ssub.s32 1, %s3
  %s6 = scalar_select 0, %s5, %s3
  // Predicated region
  $region2: #{_forward.1} parent=0 // pred_check
    _
  $region3: #{_forward.1} parent=0 // pred_check_branch
    %8 = sbr.rel (0) target = $region5
  $region4: #{_forward.1} parent=0 // pred_region
    %s9 = sadd.s32 0, 0
    %s10 = smul.u32 2, %s9
    %p11 = scmp.lt.s32.totalorder %s10, 1
    %s12 = scalar_select %p11, %s10, 1
    %s13 = smul.addr %s12, 8
    %s14 = scalar_lea.vmem %s0, %s13
    %s15 = sadd.s32 0, 0
    %s16 = smul.u32 2, %s15
  $region5: #{_forward.1} parent=0 // pred_fallthru
    _
  // Predicated region
  $region6: #{_forward.1} parent=0 // pred_check
    _
  $region7: #{_forward.1} parent=0 // pred_check_branch
    %18 = sbr.rel (0) target = $region9
  $region8: #{_forward.1} parent=0 // pred_region
    %s19 = sadd.s32 0, 0
    %s20 = smul.u32 2, %s19
    %p21 = scmp.lt.s32.totalorder %s20, 1
    %s22 = scalar_select %p21, %s20, 1
    %s23 = smul.addr %s22, 2
    %s24 = scalar_lea.vmem %s1, %s23
    %s25 = sadd.s32 0, 0
    %s26 = smul.u32 2, %s25
  $region9: #{_forward.1} parent=0 // pred_fallthru
    _
  %s27 = sadd.s32 0, 0
  %s28 = smul.u32 2, %s27
  %p29 = scmp.lt.s32.totalorder %s28, 1
  %s30 = scalar_select %p29, %s28, 1
  %s31 = smul.addr %s30, 8
  %s32 = scalar_lea.vmem %s0, %s31
  %s33 = sadd.s32 0, 0
  %s34 = smul.u32 2, %s33
  %p35 = scmp.lt.s32.totalorder %s34, 1
  %s36 = scalar_select %p35, %s34, 1
  %s37 = smul.addr %s36, 2
  %s38 = scalar_lea.vmem %s1, %s37
  %s39 = sadd.s32 0, 0
  %s40 = smul.u32 2, %s39
  %p41 = scmp.lt.s32.totalorder %s40, 1
  %s42 = scalar_select %p41, %s40, 1
  %s43 = smul.addr %s42, 8
  %s44 = scalar_lea.vmem %s0, %s43
  %s45 = sadd.s32 0, 0
  %s46 = smul.u32 2, %s45
  %s47 = sadd.s32 0, 0
  %s48 = smul.u32 2, %s47
  %p49 = scmp.lt.s32.totalorder %s48, 1
  %s50 = scalar_select %p49, %s48, 1
  %s51 = smul.addr %s50, 2
  %s52 = scalar_lea.vmem %s1, %s51
  %s53 = sadd.s32 0, 0
  %s54 = smul.u32 2, %s53
  %p55 = scmp.eq.s32.totalorder 0, 0
  // Predicated region
  $region10: #{_forward.1} parent=0 // pred_check
    %p56 = pneg %p55
  $region11: #{_forward.1} parent=0 // pred_check_branch
    %58 = sbr.rel (%p56) target = $region13
  $region12: #{_forward.1} parent=0 // pred_region
    %59 = vst [vmem:[%s2] sm:$0xff] 0.0
  $region13: #{_forward.1} parent=0 // pred_fallthru
    _
  %v60 = vld [vmem:[%s44] sm:$0xff]
  %v61 = vld [vmem:[%s44 + $0x8] sm:$0xff]
  %v62 = vxor.u32 %v60, 2147483648
  %v63 = vxor.u32 %v61, 2147483648
  %v64 = vmul.f32 %v62, 1.442695
  %v65 = vpow.pop %v64
  %v66 = vmul.f32 %v63, 1.442695
  %v67 = vpow.pop %v66
  %v68 = vadd.f32 %v65, 1.0
  %v69 = vadd.f32 %v67, 1.0
  %v70 = vrcp.pop %v68
  %v71 = vmul.f32 1.0, %v70
  %v72 = vrcp.pop %v69
  %v73 = vmul.f32 1.0, %v72
  %v74 = vld [vmem:[%s52] sm:$0x3]
  %v75 = vld [vmem:[%s52 + $0x2] sm:$0x3]
  %v76 = vunpack.c.0.s8 %v74
  %v77 = vunpack.c.0.s8 %v75
  %vm78 = vcmp.eq.s32.totalorder %v76, 0
  %vm79 = vcmp.eq.s32.totalorder %v77, 0
  %v80 = vsel %vm78, 1, 0
  %v81 = vsel %vm79, 1, 0
  %v82 = vcvt.s32.f32 %v80
  %v83 = vcvt.s32.f32 %v81
  %vm84 = vcmp.eq.s32.totalorder %v76, 1
  %vm85 = vcmp.eq.s32.totalorder %v77, 1
  %v86 = vsel %vm84, 1, 0
  %v87 = vsel %vm85, 1, 0
  %v88 = vcvt.s32.f32 %v86
  %v89 = vcvt.s32.f32 %v87
  %vm90 = vcmp.eq.s32.totalorder %v76, 2
  %vm91 = vcmp.eq.s32.totalorder %v77, 2
  %v92 = vsel %vm90, 1, 0
  %v93 = vsel %vm91, 1, 0
  %v94 = vcvt.s32.f32 %v92
  %v95 = vcvt.s32.f32 %v93
  %v96 = vld [vmem:[%s2] sm:$0x1]
  %v97 = vmul.f32 %v82, %v71
  %v98 = vmul.f32 %v83, %v73
  %v99 = vadd.f32 %v97, %v98
  %v100 = vrot.slane %v99, 4
  %v101 = vadd.f32 %v99, %v100
  %v102 = vrot.slane %v101, 2
  %v103 = vadd.f32 %v101, %v102
  %v104 = vrot.slane %v103, 1
  %v105 = vadd.f32 %v103, %v104
  %v106 = vadd.f32 %v96, %v105
  %107 = vst [vmem:[%s2] sm:$0x1] %v106
  %v108 = vld [vmem:[%s2 + $0x3] sm:$0x1]
  %v109 = vadd.f32 %v82, %v83
  %v110 = vrot.slane %v109, 4
  %v111 = vadd.f32 %v109, %v110
  %v112 = vrot.slane %v111, 2
  %v113 = vadd.f32 %v111, %v112
  %v114 = vrot.slane %v113, 1
  %v115 = vadd.f32 %v113, %v114
  %v116 = vadd.f32 %v108, %v115
  %117 = vst [vmem:[%s2 + $0x3] sm:$0x1] %v116
  %v118 = vld [vmem:[%s2 + $0x1] sm:$0x1]
  %v119 = vmul.f32 %v88, %v71
  %v120 = vmul.f32 %v89, %v73
  %v121 = vadd.f32 %v119, %v120
  %v122 = vrot.slane %v121, 4
  %v123 = vadd.f32 %v121, %v122
  %v124 = vrot.slane %v123, 2
  %v125 = vadd.f32 %v123, %v124
  %v126 = vrot.slane %v125, 1
  %v127 = vadd.f32 %v125, %v126
  %v128 = vadd.f32 %v118, %v127
  %129 = vst [vmem:[%s2 + $0x1] sm:$0x1] %v128
  %v130 = vld [vmem:[%s2 + $0x4] sm:$0x1]
  %v131 = vadd.f32 %v88, %v89
  %v132 = vrot.slane %v131, 4
  %v133 = vadd.f32 %v131, %v132
  %v134 = vrot.slane %v133, 2
  %v135 = vadd.f32 %v133, %v134
  %v136 = vrot.slane %v135, 1
  %v137 = vadd.f32 %v135, %v136
  %v138 = vadd.f32 %v130, %v137
  %139 = vst [vmem:[%s2 + $0x4] sm:$0x1] %v138
  %v140 = vld [vmem:[%s2 + $0x2] sm:$0x1]
  %v141 = vmul.f32 %v94, %v71
  %v142 = vmul.f32 %v95, %v73
  %v143 = vadd.f32 %v141, %v142
  %v144 = vrot.slane %v143, 4
  %v145 = vadd.f32 %v143, %v144
  %v146 = vrot.slane %v145, 2
  %v147 = vadd.f32 %v145, %v146
  %v148 = vrot.slane %v147, 1
  %v149 = vadd.f32 %v147, %v148
  %v150 = vadd.f32 %v140, %v149
  %151 = vst [vmem:[%s2 + $0x2] sm:$0x1] %v150
  %v152 = vld [vmem:[%s2 + $0x5] sm:$0x1]
  %v153 = vadd.f32 %v94, %v95
  %v154 = vrot.slane %v153, 4
  %v155 = vadd.f32 %v153, %v154
  %v156 = vrot.slane %v155, 2
  %v157 = vadd.f32 %v155, %v156
  %v158 = vrot.slane %v157, 1
  %v159 = vadd.f32 %v157, %v158
  %v160 = vadd.f32 %v152, %v159
  %161 = vst [vmem:[%s2 + $0x5] sm:$0x1] %v160
  // Predicated region
  $region14: #{_forward.1} parent=0 // pred_check
    _
  $region15: #{_forward.1} parent=0 // pred_check_branch
    %163 = sbr.rel (0) target = $region17
  $region16: #{_forward.1} parent=0 // pred_region
    _
  $region17: #{_forward.1} parent=0 // pred_fallthru
    _
  // Predicated region
  $region18: #{_forward.1} parent=0 // pred_check
    _
  $region19: #{_forward.1} parent=0 // pred_check_branch
    %165 = sbr.rel (0) target = $region21
  $region20: #{_forward.1} parent=0 // pred_region
    _
  $region21: #{_forward.1} parent=0 // pred_fallthru
    _

</llo_original>
